<compile_context>
chip_gen: v5e
topology: v5e:2x2
jax: 0.10.0
libtpu: 0.0.40
codegen_flags: <defaults>
</compile_context>

<pallas_src>
import functools

import jax
import jax.numpy as jnp
from jax.experimental import pallas as pl
from jax.experimental.pallas import tpu as pltpu

_EPS = 1e-5          # nn.LayerNorm default eps
_NEG_INF = -1e30     # additive mask for padded key positions


def _round_up(x, m):
    return (x + m - 1) // m * m


def _layernorm(x, g, b):
    mu = jnp.mean(x, axis=-1, keepdims=True)
    var = jnp.mean(jnp.square(x - mu), axis=-1, keepdims=True)
    return (x - mu) * jax.lax.rsqrt(var + _EPS) * g + b


def _mm(a, b, mm_dtype):
    # MXU matmul with configurable operand dtype and f32 accumulation.
    return jnp.dot(a.astype(mm_dtype), b.astype(mm_dtype),
                   preferred_element_type=jnp.float32)


def _pick_batch_tile(batch):
    # >=2 grid steps when possible (shards across v7x's two TensorCores),
    # otherwise the whole batch in one step.
    if batch >= 2 and batch % 2 == 0:
        return batch // 2
    return 1


# ----------------------------- Pallas kernels ------------------------------

def _patch_embed_kernel(x_ref, g1_ref, b1_ref, w_ref, bias_ref, g2_ref, b2_ref,
                        o_ref, *, mm_dtype):
    # row-block of patches: LN -> Linear -> LN
    xn = _layernorm(x_ref[...], g1_ref[...], b1_ref[...])
    y = _mm(xn, w_ref[...], mm_dtype) + bias_ref[...]
    o_ref[...] = _layernorm(y, g2_ref[...], b2_ref[...])


def _transformer_kernel(x_ref, mask_ref,
                        lnag_ref, lnab_ref, wqkv_ref, wout_ref, bout_ref,
                        lnfg_ref, lnfb_ref, w1_ref, b1_ref, w2_ref, b2_ref,
                        lnhg_ref, lnhb_ref, whead_ref, bhead_ref,
                        o_ref, *, depth, heads, dim_head, mm_dtype):
    bt, np_, d = x_ref.shape
    inner = heads * dim_head
    r = bt * np_

    x = x_ref[...].reshape(r, d)            # flatten (batch_tile, tokens) rows
    kmask = mask_ref[...]                   # (1, np_); 0 real key, -1e30 padded

    for l in range(depth):                  # static unroll (depth is small)
        # -------------------- attention --------------------
        xn = _layernorm(x, lnag_ref[l], lnab_ref[l])
        qkv = _mm(xn, wqkv_ref[l], mm_dtype)        # ONE fused QKV matmul (r, 3*inner)
        qkv = qkv.reshape(bt, np_, 3 * inner)       # scale already folded into Q cols
        houts = []
        for h in range(heads):                      # per-head scores/AV (K=dim_head is inherent)
            q = qkv[:, :, h * dim_head:(h + 1) * dim_head]
            k = qkv[:, :, inner + h * dim_head: inner + (h + 1) * dim_head]
            v = qkv[:, :, 2 * inner + h * dim_head: 2 * inner + (h + 1) * dim_head]
            dots = jnp.einsum('bnd,bmd->bnm', q, k,
                              preferred_element_type=jnp.float32) + kmask
            dots = dots - jnp.max(dots, axis=-1, keepdims=True)
            e = jnp.exp(dots)
            attn = e * pl.reciprocal(jnp.sum(e, axis=-1, keepdims=True),
                                     approx=True)
            oh = jnp.einsum('bnm,bmd->bnd', attn, v,
                            preferred_element_type=jnp.float32)
            houts.append(oh.reshape(r, dim_head))
        out = jnp.concatenate(houts, axis=-1)       # (r, inner) — heads re-merged
        x = x + _mm(out, wout_ref[l], mm_dtype) + bout_ref[l]   # ONE output projection

        # -------------------- feed-forward --------------------
        xn = _layernorm(x, lnfg_ref[l], lnfb_ref[l])
        h1 = _mm(xn, w1_ref[l], mm_dtype) + b1_ref[l]
        h1 = jax.nn.gelu(h1, approximate=False)     # exact GELU (= nn.GELU)
        x = x + _mm(h1, w2_ref[l], mm_dtype) + b2_ref[l]

    # -------------------- classification head (cls token) --------------------
    cls = x.reshape(bt, np_, d)[:, 0, :]            # (bt, d)
    cls_n = _layernorm(cls, lnhg_ref[...], lnhb_ref[...])
    logits = _mm(cls_n, whead_ref[...], mm_dtype) + bhead_ref[...]   # (bt, nc_pad)
    o_ref[...] = logits[:, None, :]


# ------------------------------- wrappers -----------------------------------

def patch_embed(x2, p, mm_dtype):
    rows, patch_dim = x2.shape
    dim = p["w"].shape[1]
    rb = min(256, _round_up(rows, 8))               # row tile (>= 8 sublanes)
    rows_pad = _round_up(rows, rb)
    if rows_pad != rows:
        x2 = jnp.pad(x2, ((0, rows_pad - rows), (0, 0)))
    out = pl.pallas_call(
        functools.partial(_patch_embed_kernel, mm_dtype=mm_dtype),
        out_shape=jax.ShapeDtypeStruct((rows_pad, dim), jnp.float32),
        grid=(rows_pad // rb,),
        in_specs=[
            pl.BlockSpec((rb, patch_dim), lambda i: (i, 0)),
            pl.BlockSpec((1, patch_dim), lambda i: (0, 0)),
            pl.BlockSpec((1, patch_dim), lambda i: (0, 0)),
            pl.BlockSpec((patch_dim, dim), lambda i: (0, 0)),
            pl.BlockSpec((1, dim), lambda i: (0, 0)),
            pl.BlockSpec((1, dim), lambda i: (0, 0)),
            pl.BlockSpec((1, dim), lambda i: (0, 0)),
        ],
        out_specs=pl.BlockSpec((rb, dim), lambda i: (i, 0)),
        compiler_params=pltpu.CompilerParams(
            dimension_semantics=("parallel",)),
    )(x2, p["ln1_g"], p["ln1_b"], p["w"], p["b"], p["ln2_g"], p["ln2_b"])
    return out[:rows]


def transformer_and_head(x_pad, stk, head_p, cfg, n_real):
    B, Np, D = x_pad.shape
    depth = stk["w_qkv"].shape[0]
    inner = stk["w_out"].shape[1]
    H = stk["w1"].shape[2]
    nc_pad = head_p["w"].shape[1]
    mm_dtype = cfg.get("mm_dtype", jnp.float32)

    # key-padding mask (computed once in the wrapper, broadcast in-kernel)
    mask = jnp.where(jnp.arange(Np)[None, :] < n_real, 0.0, _NEG_INF)
    mask = mask.astype(jnp.float32)

    bt = _pick_batch_tile(B)
    grid = (B // bt,)

    const3 = lambda i: (0, 0, 0)
    const2 = lambda i: (0, 0)

    kernel = functools.partial(_transformer_kernel, depth=depth,
                               heads=cfg["heads"], dim_head=cfg["dim_head"],
                               mm_dtype=mm_dtype)
    out = pl.pallas_call(
        kernel,
        out_shape=jax.ShapeDtypeStruct((B, 1, nc_pad), jnp.float32),
        grid=grid,
        in_specs=[
            pl.BlockSpec((bt, Np, D), lambda i: (i, 0, 0)),      # activations
            pl.BlockSpec((1, Np), const2),                       # key mask
            pl.BlockSpec((depth, 1, D), const3),                 # attn LN gamma
            pl.BlockSpec((depth, 1, D), const3),                 # attn LN beta
            pl.BlockSpec((depth, D, 3 * inner), const3),         # fused W_qkv
            pl.BlockSpec((depth, inner, D), const3),             # W_out
            pl.BlockSpec((depth, 1, D), const3),                 # b_out
            pl.BlockSpec((depth, 1, D), const3),                 # ff LN gamma
            pl.BlockSpec((depth, 1, D), const3),                 # ff LN beta
            pl.BlockSpec((depth, D, H), const3),                 # W1
            pl.BlockSpec((depth, 1, H), const3),                 # b1
            pl.BlockSpec((depth, H, D), const3),                 # W2
            pl.BlockSpec((depth, 1, D), const3),                 # b2
            pl.BlockSpec((1, D), const2),                        # head LN gamma
            pl.BlockSpec((1, D), const2),                        # head LN beta
            pl.BlockSpec((D, nc_pad), const2),                   # head W (lane-padded)
            pl.BlockSpec((1, nc_pad), const2),                   # head b (lane-padded)
        ],
        out_specs=pl.BlockSpec((bt, 1, nc_pad), lambda i: (i, 0, 0)),
        compiler_params=pltpu.CompilerParams(
            dimension_semantics=("parallel",),
            vmem_limit_bytes=32 * 1024 * 1024),
    )(x_pad, mask,
      stk["ln_a_g"], stk["ln_a_b"], stk["w_qkv"], stk["w_out"], stk["b_out"],
      stk["ln_f_g"], stk["ln_f_b"], stk["w1"], stk["b1"], stk["w2"], stk["b2"],
      head_p["ln_g"], head_p["ln_b"], head_p["w"], head_p["b"])
    return out[:, 0, :]


def prepare_params(params, cfg):
    """Stack per-layer params along a depth axis, fold softmax scale into Q,
    pad the head projection to a lane-dense (128-multiple) output."""
    heads, dh = cfg["heads"], cfg["dim_head"]
    inner = heads * dh
    scale = dh ** -0.5
    ncls = cfg["num_classes"]
    layers = params["layers"]

    def stack(sub, name):
        return jnp.stack([l[sub][name] for l in layers], axis=0)

    wqkv = stack("attn", "w_qkv")                      # (depth, D, 3*inner)
    wqkv = wqkv.at[:, :, :inner].multiply(scale)       # fold 1/sqrt(dh) into Q
    stk = {
        "ln_a_g": stack("attn", "ln_g"), "ln_a_b": stack("attn", "ln_b"),
        "w_qkv": wqkv,
        "w_out": stack("attn", "w_out"), "b_out": stack("attn", "b_out"),
        "ln_f_g": stack("ff", "ln_g"), "ln_f_b": stack("ff", "ln_b"),
        "w1": stack("ff", "w1"), "b1": stack("ff", "b1"),
        "w2": stack("ff", "w2"), "b2": stack("ff", "b2"),
    }
    nc_pad = _round_up(ncls, 128)
    hp = params["head"]
    head_p = {
        "ln_g": hp["ln_g"], "ln_b": hp["ln_b"],
        "w": jnp.pad(hp["w"], ((0, 0), (0, nc_pad - ncls))),
        "b": jnp.pad(hp["b"], ((0, 0), (0, nc_pad - ncls))),
    }
    return stk, head_p


def rolenet_forward(series, params, cfg):
    B, C, L = series.shape
    P = cfg["patch_size"]
    N = L // P
    D = cfg["dim"]
    mm_dtype = cfg.get("mm_dtype", jnp.float32)

    # glue: Rearrange('b c (n p) -> b n (p c)')
    xp = series.reshape(B, C, N, P).transpose(0, 2, 3, 1).reshape(B * N, P * C)
    emb = patch_embed(xp, params["patch"], mm_dtype).reshape(B, N, D)

    # glue: cls-token pack + positional embedding (dropout = identity, p=0)
    cls = jnp.broadcast_to(params["cls_token"][None, None, :], (B, 1, D))
    x = jnp.concatenate([cls, emb], axis=1) + params["pos_embedding"][:, :N + 1]

    # pad the token axis to a sublane-friendly multiple of 8 (masked in-kernel)
    N1 = N + 1
    Np = _round_up(N1, 8)
    if Np != N1:
        x = jnp.pad(x, ((0, 0), (0, Np - N1), (0, 0)))

    stk, head_p = prepare_params(params, cfg)
    logits = transformer_and_head(x, stk, head_p, cfg, n_real=N1)
    return logits[:, :cfg["num_classes"]]


# ------------------------- pure-JAX reference --------------------------------

def rolenet_reference(series, params, cfg):
    B, C, L = series.shape
    P, D, heads, dh = cfg["patch_size"], cfg["dim"], cfg["heads"], cfg["dim_head"]
    N = L // P
    N1 = N + 1
    inner = heads * dh
    scale = dh ** -0.5
    xp = series.reshape(B, C, N, P).transpose(0, 2, 3, 1).reshape(B, N, P * C)
    p = params["patch"]
    x = _layernorm(xp, p["ln1_g"], p["ln1_b"]) @ p["w"] + p["b"]
    x = _layernorm(x, p["ln2_g"], p["ln2_b"])
    cls = jnp.broadcast_to(params["cls_token"][None, None, :], (B, 1, D))
    x = jnp.concatenate([cls, x], axis=1) + params["pos_embedding"][:, :N + 1]
    for layer in params["layers"]:
        a = layer["attn"]
        xn = _layernorm(x, a["ln_g"], a["ln_b"])
        qkv = xn @ a["w_qkv"]
        q, k, v = jnp.split(qkv, 3, axis=-1)
        q = q.reshape(B, N1, heads, dh).transpose(0, 2, 1, 3)
        k = k.reshape(B, N1, heads, dh).transpose(0, 2, 1, 3)
        v = v.reshape(B, N1, heads, dh).transpose(0, 2, 1, 3)
        dots = jnp.einsum("bhnd,bhmd->bhnm", q, k) * scale
        attn = jax.nn.softmax(dots, axis=-1)
        out = jnp.einsum("bhnm,bhmd->bhnd", attn, v)
        out = out.transpose(0, 2, 1, 3).reshape(B, N1, inner)
        x = x + out @ a["w_out"] + a["b_out"]
        f = layer["ff"]
        xn = _layernorm(x, f["ln_g"], f["ln_b"])
        hdn = jax.nn.gelu(xn @ f["w1"] + f["b1"], approximate=False)
        x = x + hdn @ f["w2"] + f["b2"]
    hp = params["head"]
    cls_out = x[:, 0, :]
    return _layernorm(cls_out, hp["ln_g"], hp["ln_b"]) @ hp["w"] + hp["b"]


# ------------------------------ params init ----------------------------------

def init_params(key, cfg):
    P, C, dim = cfg["patch_size"], cfg["channels"], cfg["dim"]
    N = cfg["seq_len"] // P
    patch_dim = C * P
    heads, dh = cfg["heads"], cfg["dim_head"]
    mlp, ncls = cfg["mlp_dim"], cfg["num_classes"]
    inner = heads * dh

    keys = iter(jax.random.split(key, 16 + 8 * cfg["depth"]))
    w = lambda shape: 0.02 * jax.random.normal(next(keys), shape, jnp.float32)
    zeros = lambda d: jnp.zeros((1, d), jnp.float32)
    ones = lambda d: jnp.ones((1, d), jnp.float32)

    params = {
        "patch": {"ln1_g": ones(patch_dim), "ln1_b": zeros(patch_dim),
                  "w": w((patch_dim, dim)), "b": zeros(dim),
                  "ln2_g": ones(dim), "ln2_b": zeros(dim)},
        "pos_embedding": jax.random.normal(next(keys), (1, N + 1, dim), jnp.float32),
        "cls_token": jax.random.normal(next(keys), (dim,), jnp.float32),
        "layers": [],
        "head": {"ln_g": ones(dim), "ln_b": zeros(dim),
                 "w": w((dim, ncls)), "b": zeros(ncls)},
    }
    for _ in range(cfg["depth"]):
        params["layers"].append({
            "attn": {"ln_g": ones(dim), "ln_b": zeros(dim),
                     "w_qkv": w((dim, 3 * inner)),   # fused to_qkv (bias=False)
                     "w_out": w((inner, dim)),
                     "b_out": zeros(dim)},
            "ff": {"ln_g": ones(dim), "ln_b": zeros(dim),
                   "w1": w((dim, mlp)), "b1": zeros(mlp),
                   "w2": w((mlp, dim)), "b2": zeros(dim)},
        })
    return params


if __name__ == "__main__":
    cfg = dict(seq_len=16, patch_size=4, num_classes=5, dim=32, depth=2,
               heads=4, mlp_dim=64, channels=3, dim_head=8,
               mm_dtype=jnp.float32)   # use jnp.bfloat16 on v6e/v7x for ~2x MXU
    key = jax.random.PRNGKey(0)
    k_param, k_data = jax.random.split(key)
    params = init_params(k_param, cfg)
    series = jax.random.normal(k_data, (2, cfg["channels"], cfg["seq_len"]),
                               jnp.float32)

    out = jax.block_until_ready(rolenet_forward(series, params, cfg))
    assert out.shape == (2, cfg["num_classes"]), out.shape

    ref = rolenet_reference(series, params, cfg)
    assert jnp.allclose(out, ref, atol=1e-2, rtol=1e-2), (out, ref)

    print("KERNEL_OK")
</pallas_src>

<mosaic_0001>
module attributes {stable_mosaic.version = 11 : i64} {
  func.func @_patch_embed_kernel(%arg0: i32, %arg1: memref<8x12xf32, #tpu.memory_space<vmem>>, %arg2: memref<1x12xf32, #tpu.memory_space<vmem>>, %arg3: memref<1x12xf32, #tpu.memory_space<vmem>>, %arg4: memref<12x32xf32, #tpu.memory_space<vmem>>, %arg5: memref<1x32xf32, #tpu.memory_space<vmem>>, %arg6: memref<1x32xf32, #tpu.memory_space<vmem>>, %arg7: memref<1x32xf32, #tpu.memory_space<vmem>>, %arg8: memref<8x32xf32, #tpu.memory_space<vmem>>) attributes {dimension_semantics = [#tpu.dimension_semantics<parallel>], iteration_bounds = array<i64: 1>, scalar_prefetch = 0 : i64, scratch_operands = 0 : i64, tpu.core_type = #tpu.core_type<tc>, window_params = [{transform_indices = @transform_0, window_bounds = array<i64: 8, 12>}, {pipeline_mode = #tpu.pipeline_mode<synchronous>, transform_indices = @transform_1, window_bounds = array<i64: 1, 12>}, {pipeline_mode = #tpu.pipeline_mode<synchronous>, transform_indices = @transform_2, window_bounds = array<i64: 1, 12>}, {pipeline_mode = #tpu.pipeline_mode<synchronous>, transform_indices = @transform_3, window_bounds = array<i64: 12, 32>}, {pipeline_mode = #tpu.pipeline_mode<synchronous>, transform_indices = @transform_4, window_bounds = array<i64: 1, 32>}, {pipeline_mode = #tpu.pipeline_mode<synchronous>, transform_indices = @transform_5, window_bounds = array<i64: 1, 32>}, {pipeline_mode = #tpu.pipeline_mode<synchronous>, transform_indices = @transform_6, window_bounds = array<i64: 1, 32>}, {transform_indices = @transform_7, window_bounds = array<i64: 8, 32>}]} {
    %c0 = arith.constant 0 : index
    %c0_0 = arith.constant 0 : index
    %0 = vector.load %arg1[%c0, %c0_0] : memref<8x12xf32, #tpu.memory_space<vmem>>, vector<8x12xf32>
    %c0_1 = arith.constant 0 : index
    %c0_2 = arith.constant 0 : index
    %1 = vector.load %arg2[%c0_1, %c0_2] : memref<1x12xf32, #tpu.memory_space<vmem>>, vector<1x12xf32>
    %c0_3 = arith.constant 0 : index
    %c0_4 = arith.constant 0 : index
    %2 = vector.load %arg3[%c0_3, %c0_4] : memref<1x12xf32, #tpu.memory_space<vmem>>, vector<1x12xf32>
    %cst = arith.constant dense<0.000000e+00> : vector<8xf32>
    %3 = vector.multi_reduction <add>, %0, %cst [1] : vector<8x12xf32> to vector<8xf32>
    %4 = vector.shape_cast %3 : vector<8xf32> to vector<8x1xf32>
    %cst_5 = arith.constant 1.200000e+01 : f32
    %5 = vector.broadcast %cst_5 : f32 to vector<8x1xf32>
    %6 = arith.divf %4, %5 : vector<8x1xf32>
    %7 = vector.broadcast %6 : vector<8x1xf32> to vector<8x12xf32>
    %8 = arith.subf %0, %7 : vector<8x12xf32>
    %9 = arith.mulf %8, %8 : vector<8x12xf32>
    %cst_6 = arith.constant dense<0.000000e+00> : vector<8xf32>
    %10 = vector.multi_reduction <add>, %9, %cst_6 [1] : vector<8x12xf32> to vector<8xf32>
    %11 = vector.shape_cast %10 : vector<8xf32> to vector<8x1xf32>
    %cst_7 = arith.constant 1.200000e+01 : f32
    %12 = vector.broadcast %cst_7 : f32 to vector<8x1xf32>
    %13 = arith.divf %11, %12 : vector<8x1xf32>
    %14 = vector.broadcast %6 : vector<8x1xf32> to vector<8x12xf32>
    %15 = arith.subf %0, %14 : vector<8x12xf32>
    %cst_8 = arith.constant 9.99999974E-6 : f32
    %16 = vector.broadcast %cst_8 : f32 to vector<8x1xf32>
    %17 = arith.addf %13, %16 : vector<8x1xf32>
    %18 = math.rsqrt %17 : vector<8x1xf32>
    %19 = vector.broadcast %18 : vector<8x1xf32> to vector<8x12xf32>
    %20 = arith.mulf %15, %19 : vector<8x12xf32>
    %21 = vector.broadcast %1 : vector<1x12xf32> to vector<8x12xf32>
    %22 = arith.mulf %20, %21 : vector<8x12xf32>
    %23 = vector.broadcast %2 : vector<1x12xf32> to vector<8x12xf32>
    %24 = arith.addf %22, %23 : vector<8x12xf32>
    %c0_9 = arith.constant 0 : index
    %c0_10 = arith.constant 0 : index
    %25 = vector.load %arg4[%c0_9, %c0_10] : memref<12x32xf32, #tpu.memory_space<vmem>>, vector<12x32xf32>
    %cst_11 = arith.constant dense<0.000000e+00> : vector<8x32xf32>
    %26 = tpu.matmul %24, %25, %cst_11 {dimension_numbers = #tpu.dot_dimension_numbers<[1], [0], [0], [1], [0, 0, 1, 1], [], []>} : vector<8x12xf32>, vector<12x32xf32>, vector<8x32xf32> -> vector<8x32xf32>
    %c0_12 = arith.constant 0 : index
    %c0_13 = arith.constant 0 : index
    %27 = vector.load %arg5[%c0_12, %c0_13] : memref<1x32xf32, #tpu.memory_space<vmem>>, vector<1x32xf32>
    %28 = vector.broadcast %27 : vector<1x32xf32> to vector<8x32xf32>
    %29 = arith.addf %26, %28 : vector<8x32xf32>
    %c0_14 = arith.constant 0 : index
    %c0_15 = arith.constant 0 : index
    %30 = vector.load %arg6[%c0_14, %c0_15] : memref<1x32xf32, #tpu.memory_space<vmem>>, vector<1x32xf32>
    %c0_16 = arith.constant 0 : index
    %c0_17 = arith.constant 0 : index
    %31 = vector.load %arg7[%c0_16, %c0_17] : memref<1x32xf32, #tpu.memory_space<vmem>>, vector<1x32xf32>
    %cst_18 = arith.constant dense<0.000000e+00> : vector<8xf32>
    %32 = vector.multi_reduction <add>, %29, %cst_18 [1] : vector<8x32xf32> to vector<8xf32>
    %33 = vector.shape_cast %32 : vector<8xf32> to vector<8x1xf32>
    %cst_19 = arith.constant 3.200000e+01 : f32
    %34 = vector.broadcast %cst_19 : f32 to vector<8x1xf32>
    %35 = arith.divf %33, %34 : vector<8x1xf32>
    %36 = vector.broadcast %35 : vector<8x1xf32> to vector<8x32xf32>
    %37 = arith.subf %29, %36 : vector<8x32xf32>
    %38 = arith.mulf %37, %37 : vector<8x32xf32>
    %cst_20 = arith.constant dense<0.000000e+00> : vector<8xf32>
    %39 = vector.multi_reduction <add>, %38, %cst_20 [1] : vector<8x32xf32> to vector<8xf32>
    %40 = vector.shape_cast %39 : vector<8xf32> to vector<8x1xf32>
    %cst_21 = arith.constant 3.200000e+01 : f32
    %41 = vector.broadcast %cst_21 : f32 to vector<8x1xf32>
    %42 = arith.divf %40, %41 : vector<8x1xf32>
    %43 = vector.broadcast %35 : vector<8x1xf32> to vector<8x32xf32>
    %44 = arith.subf %29, %43 : vector<8x32xf32>
    %cst_22 = arith.constant 9.99999974E-6 : f32
    %45 = vector.broadcast %cst_22 : f32 to vector<8x1xf32>
    %46 = arith.addf %42, %45 : vector<8x1xf32>
    %47 = math.rsqrt %46 : vector<8x1xf32>
    %48 = vector.broadcast %47 : vector<8x1xf32> to vector<8x32xf32>
    %49 = arith.mulf %44, %48 : vector<8x32xf32>
    %50 = vector.broadcast %30 : vector<1x32xf32> to vector<8x32xf32>
    %51 = arith.mulf %49, %50 : vector<8x32xf32>
    %52 = vector.broadcast %31 : vector<1x32xf32> to vector<8x32xf32>
    %53 = arith.addf %51, %52 : vector<8x32xf32>
    %c0_23 = arith.constant 0 : index
    %c0_24 = arith.constant 0 : index
    %54 = vector.load %arg8[%c0_23, %c0_24] : memref<8x32xf32, #tpu.memory_space<vmem>>, vector<8x32xf32>
    tpu.vector_store %arg8[%c0_23, %c0_24], %53 {strides = array<i32>} : memref<8x32xf32, #tpu.memory_space<vmem>>, vector<8x32xf32>,
    return
  }
  func.func @transform_0(%arg0: i32) -> (i32, i32) {
    %c0_i32 = arith.constant 0 : i32
    %c0_i32_0 = arith.constant 0 : i32
    return %arg0, %c0_i32 : i32, i32
  }
  func.func @transform_1(%arg0: i32) -> (i32, i32) {
    %c0_i32 = arith.constant 0 : i32
    %c0_i32_0 = arith.constant 0 : i32
    %c0_i32_1 = arith.constant 0 : i32
    return %c0_i32, %c0_i32_0 : i32, i32
  }
  func.func @transform_2(%arg0: i32) -> (i32, i32) {
    %c0_i32 = arith.constant 0 : i32
    %c0_i32_0 = arith.constant 0 : i32
    %c0_i32_1 = arith.constant 0 : i32
    return %c0_i32, %c0_i32_0 : i32, i32
  }
  func.func @transform_3(%arg0: i32) -> (i32, i32) {
    %c0_i32 = arith.constant 0 : i32
    %c0_i32_0 = arith.constant 0 : i32
    %c0_i32_1 = arith.constant 0 : i32
    return %c0_i32, %c0_i32_0 : i32, i32
  }
  func.func @transform_4(%arg0: i32) -> (i32, i32) {
    %c0_i32 = arith.constant 0 : i32
    %c0_i32_0 = arith.constant 0 : i32
    %c0_i32_1 = arith.constant 0 : i32
    return %c0_i32, %c0_i32_0 : i32, i32
  }
  func.func @transform_5(%arg0: i32) -> (i32, i32) {
    %c0_i32 = arith.constant 0 : i32
    %c0_i32_0 = arith.constant 0 : i32
    %c0_i32_1 = arith.constant 0 : i32
    return %c0_i32, %c0_i32_0 : i32, i32
  }
  func.func @transform_6(%arg0: i32) -> (i32, i32) {
    %c0_i32 = arith.constant 0 : i32
    %c0_i32_0 = arith.constant 0 : i32
    %c0_i32_1 = arith.constant 0 : i32
    return %c0_i32, %c0_i32_0 : i32, i32
  }
  func.func @transform_7(%arg0: i32) -> (i32, i32) {
    %c0_i32 = arith.constant 0 : i32
    %c0_i32_0 = arith.constant 0 : i32
    return %arg0, %c0_i32 : i32, i32
  }
}

</mosaic_0001>

<llo_original>
// kernel: tpu_custom_call.1
$region0: #{tpu_custom_call.1}
  #allocation0 [shape = 'u32[]', space=smem, size = 0x4, offset = 0x4, fixed_abs, tag = 'smem constant byte address 0x4 - core index']
  #allocation1 [shape = 'u32[72,128]{1,0:T(1,128)}', space=vmem, size = 0x9000, scoped, tag = 'internal scratch']
  %s0 = inlined_call_operand.hbm [shape: f32[8,12], index: 0, kind: input, shape index: {}]
  %s1 = inlined_call_operand.hbm [shape: f32[1,12], index: 1, kind: input, shape index: {}]
  %s2 = inlined_call_operand.vmem [shape: f32[1,12], index: 2, kind: input, shape index: {}]
  %s3 = inlined_call_operand.hbm [shape: f32[12,32], index: 3, kind: input, shape index: {}]
  %s4 = inlined_call_operand.vmem [shape: f32[1,32], index: 4, kind: input, shape index: {}]
  %s5 = inlined_call_operand.vmem [shape: f32[1,32], index: 5, kind: input, shape index: {}]
  %s6 = inlined_call_operand.vmem [shape: f32[1,32], index: 6, kind: input, shape index: {}]
  %s7 = inlined_call_operand.hbm [shape: f32[8,32], index: 7, kind: output, shape index: {}]
  %s8 = sld [smem:[#allocation0]]
  $region50: #{tpu_custom_call.1} parent=0
    _
  %s10 = ssub.s32 1, %s8
  %s11 = scalar_select 0, %s10, %s8
  $region1: #{tpu_custom_call.1} parent=0
    #allocation2 [shape = 'u8[4096]{0}', space=vmem, size = 0x1000, scoped, tag = 'input window, operand 0, single buffered']
    #allocation3 [shape = 's32[1]{0}', space=sflag, size = 0x4, scoped, tag = 'scoped memory for tpu_custom_call.1']
    #allocation4 [shape = 's32[1]{0}', space=sflag, size = 0x4, scoped, tag = 'scoped memory for tpu_custom_call.1']
    #allocation5 [shape = 'u8[512]{0}', space=vmem, size = 0x400, scoped, tag = 'input window, operand 1, single buffered']
    #allocation6 [shape = 's32[1]{0}', space=sflag, size = 0x4, scoped, tag = 'scoped memory for tpu_custom_call.1']
    #allocation7 [shape = 'u8[8192]{0}', space=vmem, size = 0x2000, scoped, tag = 'input window, operand 3, single buffered']
    #allocation8 [shape = 'u8[4096]{0}', space=vmem, size = 0x1000, scoped, tag = 'output window, operand 0, single buffered']
    %12 = vsyncpa [#allocation3], 0
    %13 = vsyncpa [#allocation6], 0
    %14 = vsyncpa [#allocation4], 0
    // Predicated region
    $region2: #{tpu_custom_call.1} parent=1 // pred_check
      _
    $region3: #{tpu_custom_call.1} parent=1 // pred_check_branch
      %16 = sbr.rel (0) target = $region5
    $region4: #{tpu_custom_call.1} parent=1 // pred_region
      %18 = vsyncadd [#allocation3], 0
      %s20 = sshll.u32 %s0, 4
      %s21 = int_to_ptr.hbm [resolvable:$true] %s20
      %s22 = sshll.u32 [#allocation2], 4
      %s23 = int_to_ptr.vmem [resolvable:$true] %s22
      %25 = dma.hbm_to_vmem [thread:$0]  %s21, 128, %s23, [#allocation3]
    $region5: #{tpu_custom_call.1} parent=1 // pred_fallthru
      _
    // Predicated region
    $region6: #{tpu_custom_call.1} parent=1 // pred_check
      _
    $region7: #{tpu_custom_call.1} parent=1 // pred_check_branch
      %27 = sbr.rel (0) target = $region9
    $region8: #{tpu_custom_call.1} parent=1 // pred_region
      %29 = vsyncadd [#allocation6], 0
      %s31 = sshll.u32 %s1, 4
      %s32 = int_to_ptr.hbm [resolvable:$true] %s31
      %s33 = sshll.u32 [#allocation5], 4
      %s34 = int_to_ptr.vmem [resolvable:$true] %s33
      %36 = dma.hbm_to_vmem [thread:$0]  %s32, 16, %s34, [#allocation6]
    $region9: #{tpu_custom_call.1} parent=1 // pred_fallthru
      _
    // Predicated region
    $region10: #{tpu_custom_call.1} parent=1 // pred_check
      _
    $region11: #{tpu_custom_call.1} parent=1 // pred_check_branch
      %38 = sbr.rel (0) target = $region13
    $region12: #{tpu_custom_call.1} parent=1 // pred_region
      _
    $region13: #{tpu_custom_call.1} parent=1 // pred_fallthru
      _
    // Predicated region
    $region14: #{tpu_custom_call.1} parent=1 // pred_check
      _
    $region15: #{tpu_custom_call.1} parent=1 // pred_check_branch
      %40 = sbr.rel (0) target = $region17
    $region16: #{tpu_custom_call.1} parent=1 // pred_region
      %42 = vsyncadd [#allocation6], 0
      %s43 = sshll.u32 %s3, 4
      %s44 = int_to_ptr.hbm [resolvable:$true] %s43
      %s45 = sshll.u32 [#allocation7], 4
      %s46 = int_to_ptr.vmem [resolvable:$true] %s45
      %51 = dma.hbm_to_vmem [thread:$0]  %s44, 256, %s46, [#allocation6], 128, 128, 8
    $region17: #{tpu_custom_call.1} parent=1 // pred_fallthru
      _
    // Predicated region
    $region18: #{tpu_custom_call.1} parent=1 // pred_check
      _
    $region19: #{tpu_custom_call.1} parent=1 // pred_check_branch
      %53 = sbr.rel (0) target = $region21
    $region20: #{tpu_custom_call.1} parent=1 // pred_region
      _
    $region21: #{tpu_custom_call.1} parent=1 // pred_fallthru
      _
    // Predicated region
    $region22: #{tpu_custom_call.1} parent=1 // pred_check
      _
    $region23: #{tpu_custom_call.1} parent=1 // pred_check_branch
      %55 = sbr.rel (0) target = $region25
    $region24: #{tpu_custom_call.1} parent=1 // pred_region
      _
    $region25: #{tpu_custom_call.1} parent=1 // pred_fallthru
      _
    // Predicated region
    $region26: #{tpu_custom_call.1} parent=1 // pred_check
      _
    $region27: #{tpu_custom_call.1} parent=1 // pred_check_branch
      %57 = sbr.rel (0) target = $region29
    $region28: #{tpu_custom_call.1} parent=1 // pred_region
      _
    $region29: #{tpu_custom_call.1} parent=1 // pred_fallthru
      _
    // Predicated region
    $region30: #{tpu_custom_call.1} parent=1 // pred_check
      _
    $region31: #{tpu_custom_call.1} parent=1 // pred_check_branch
      %59 = sbr.rel (0) target = $region33
    $region32: #{tpu_custom_call.1} parent=1 // pred_region
      %61 = dma.done [#allocation3], 128
    $region33: #{tpu_custom_call.1} parent=1 // pred_fallthru
      _
    // Predicated region
    $region34: #{tpu_custom_call.1} parent=1 // pred_check
      _
    $region35: #{tpu_custom_call.1} parent=1 // pred_check_branch
      %63 = sbr.rel (0) target = $region37
    $region36: #{tpu_custom_call.1} parent=1 // pred_region
      %65 = dma.done [#allocation6], 16
    $region37: #{tpu_custom_call.1} parent=1 // pred_fallthru
      _
    // Predicated region
    $region38: #{tpu_custom_call.1} parent=1 // pred_check
      _
    $region39: #{tpu_custom_call.1} parent=1 // pred_check_branch
      %67 = sbr.rel (0) target = $region41
    $region40: #{tpu_custom_call.1} parent=1 // pred_region
      %69 = dma.done [#allocation6], 256
    $region41: #{tpu_custom_call.1} parent=1 // pred_fallthru
      _
    %v70 = vld [vmem:[#allocation2] sm:$0xff]
    %v71 = vld [vmem:[#allocation5] sm:$0x1]
    %v72 = vld [vmem:[%s2] sm:$0x1]
    %vm73 = vcmask 97280
    %v74 = vsel %vm73, %v70, 0.0
    %75 = vadd.xlane.f32.xlu0 %v74
    %v76 = vpop.xlane.xlu0 %75
    %v77 = vrcp.pop 12.0
    %v78 = vmul.f32 12.0, %v77
    %v79 = vsub.f32 1.0, %v78
    %v80 = vmul.f32 %v77, %v79
    %v81 = vadd.f32 %v77, %v80
    %vm82 = vweird.f32 %v77
    %v83 = vsel %vm82, %v77, %v81
    %v84 = vmul.f32 %v76, %v83
    %v85 = vsub.f32 %v70, %v84
    %v86 = vmul.f32 %v85, %v85
    %v87 = vsel %vm73, %v86, 0.0
    %88 = vadd.xlane.f32.xlu0 %v87
    %v89 = vpop.xlane.xlu0 %88
    %v90 = vmul.f32 %v89, %v83
    %v91 = vadd.f32 %v90, 1e-05
    %v92 = vrsqrt.pop %v91
    %v93 = vmul.f32 %v92, %v91
    %v94 = vmul.f32 %v93, %v92
    %v95 = vmul.f32 0.5, %v94
    %v96 = vsub.f32 1.5, %v95
    %v97 = vmul.f32 %v92, %v96
    %vm98 = vweird.f32 %v91
    %vm99 = vweird.f32 %v92
    %vm100 = vmor %vm98, %vm99
    %v101 = vsel %vm100, %v92, %v97
    %v102 = vmul.f32 %v85, %v101
    %v104 = vperm.slane %v71, 0
    %v106 = vmul.f32 %v102, %v104
    %v108 = vperm.slane %v72, 0
    %v110 = vadd.f32 %v106, %v108
    %v111 = vld [vmem:[#allocation7] sm:$0xff]
    %v112 = vld [vmem:[#allocation7 + $0x8] sm:$0xf]
    %v113 = vld [vmem:[%s4] sm:$0x1]
    %v115 = vperm.slane %v113, 0
    %v118 = vsel %vm73, %v110, 0
    %vm120 = vcmask 1043456
    %v122 = vsel %vm120, %v112, 0
    %124 = vmatpush.msra.mxu0 0.0
    %125 = vmatpush.msra.mxu0 0.0
    %126 = vmatpush.msra.mxu0 0.0
    %127 = vmatpush.msra.mxu0 0.0
    %128 = vmatpush.msra.mxu0 0.0
    %129 = vmatpush.msra.mxu0 0.0
    %130 = vmatpush.msra.mxu0 0.0
    %131 = vmatpush.msra.mxu0 0.0
    %132 = vmatpush.msra.mxu0 0.0
    %133 = vmatpush.msra.mxu0 0.0
    %134 = vmatpush.msra.mxu0 0.0
    %135 = vmatpush.msra.mxu0 0.0
    %136 = vmatpush.msra.mxu0 0.0
    %137 = vmatpush.msra.mxu0 0.0
    %138 = vmatpush.msra.mxu0 %v122
    %139 = vmatpush.msra.mxu0 %v111
    %140 = vmatmul.f32.gmra.mxu0 %v118
    %v141 = vpop.f32.mrf.mxu0
    %v142 = vadd.f32 %v115, %v141
    %143 = vdwg.mxu0
    %v144 = vld [vmem:[%s5] sm:$0x1]
    %v145 = vld [vmem:[%s6] sm:$0x1]
    %vm146 = vcmask 261120
    %v147 = vsel %vm146, %v142, 0.0
    %148 = vadd.xlane.f32.xlu0 %v147
    %v149 = vpop.xlane.xlu0 %148
    %v150 = vrcp.pop 32.0
    %v151 = vmul.f32 32.0, %v150
    %v152 = vsub.f32 1.0, %v151
    %v153 = vmul.f32 %v150, %v152
    %v154 = vadd.f32 %v150, %v153
    %vm155 = vweird.f32 %v150
    %v156 = vsel %vm155, %v150, %v154
    %v157 = vmul.f32 %v149, %v156
    %v158 = vsub.f32 %v142, %v157
    %v159 = vmul.f32 %v158, %v158
    %v160 = vsel %vm146, %v159, 0.0
    %161 = vadd.xlane.f32.xlu0 %v160
    %v162 = vpop.xlane.xlu0 %161
    %v163 = vmul.f32 %v162, %v156
    %v164 = vadd.f32 %v163, 1e-05
    %v165 = vrsqrt.pop %v164
    %v166 = vmul.f32 %v165, %v164
    %v167 = vmul.f32 %v166, %v165
    %v168 = vmul.f32 0.5, %v167
    %v169 = vsub.f32 1.5, %v168
    %v170 = vmul.f32 %v165, %v169
    %vm171 = vweird.f32 %v164
    %vm172 = vweird.f32 %v165
    %vm173 = vmor %vm171, %vm172
    %v174 = vsel %vm173, %v165, %v170
    %v175 = vmul.f32 %v158, %v174
    %v177 = vperm.slane %v144, 0
    %v179 = vmul.f32 %v175, %v177
    %v181 = vperm.slane %v145, 0
    %v183 = vadd.f32 %v179, %v181
    %184 = vst.msk [vmem:[#allocation8] sm:$0xff] %vm146, %v183
    // Predicated region
    $region42: #{tpu_custom_call.1} parent=1 // pred_check
      _
    $region43: #{tpu_custom_call.1} parent=1 // pred_check_branch
      %186 = sbr.rel (0) target = $region45
    $region44: #{tpu_custom_call.1} parent=1 // pred_region
      %188 = vsyncadd [#allocation4], 0
      %s190 = sshll.u32 [#allocation8], 4
      %s191 = int_to_ptr.vmem [resolvable:$true] %s190
      %s192 = sshll.u32 %s7, 4
      %s193 = int_to_ptr.hbm [resolvable:$true] %s192
      %195 = dma.vmem_to_hbm [thread:$0]  %s191, 128, %s193, [#allocation4]
    $region45: #{tpu_custom_call.1} parent=1 // pred_fallthru
      _
    // Predicated region
    $region46: #{tpu_custom_call.1} parent=1 // pred_check
      _
    $region47: #{tpu_custom_call.1} parent=1 // pred_check_branch
      %197 = sbr.rel (0) target = $region49
    $region48: #{tpu_custom_call.1} parent=1 // pred_region
      %199 = dma.done [#allocation4], 128
    $region49: #{tpu_custom_call.1} parent=1 // pred_fallthru
      _
    %200 = vsyncpa [#allocation3], 1
    %201 = vsyncpa [#allocation6], 1
    %202 = vsyncpa [#allocation4], 1

</llo_original>
